<compile_context>
chip_gen: v7x
topology: tpu7x:2x2x1
jax: 0.10.0
libtpu: 0.0.40
codegen_flags: <defaults>
</compile_context>

<pallas_src>
import jax
import jax.numpy as jnp
from jax.experimental import pallas as pl
from jax.experimental.pallas import tpu as pltpu


def _inconv_kernel(w_ref, x_ref, gamma_ref, beta_ref, o_ref):
    # w_ref:     (Cout, K)    conv weights, K = 9*Cin, ordered (kh, kw, cin)
    # x_ref:     (K, HW)      im2col patches for one batch element (batch squeezed)
    # gamma_ref: (Cout, 1)    instance-norm scale (f32)
    # beta_ref:  (Cout, 1)    instance-norm shift (f32)
    # o_ref:     (Cout, HW)   output tile (batch squeezed), HW lane-dense
    hw = o_ref.shape[-1]

    # Single fused 3x3-conv matmul on the MXU, f32 accumulation.
    acc = jnp.dot(w_ref[...], x_ref[...], preferred_element_type=jnp.float32)

    # InstanceNorm2d (biased variance, eps=1e-5) with affine folded in, one
    # reduction pass (sum + sumsq) and one elementwise pass + ReLU.  All in f32.
    inv_hw = jnp.float32(1.0 / hw)
    s1 = jnp.sum(acc, axis=-1, keepdims=True)            # (Cout, 1)
    s2 = jnp.sum(acc * acc, axis=-1, keepdims=True)      # (Cout, 1)
    mean = s1 * inv_hw
    var = s2 * inv_hw - mean * mean
    scale = gamma_ref[...] * jax.lax.rsqrt(var + 1e-5)   # (Cout, 1)
    shift = beta_ref[...] - mean * scale                 # (Cout, 1)

    o_ref[...] = jnp.maximum(acc * scale + shift, 0.0).astype(o_ref.dtype)


def in_conv_block(x_nchw, weight_oihw, gamma, beta, *, compute_dtype=jnp.float32):
    """Forward of INConvBlock (instance_norm=True path, stride=1, pad=1).

    x_nchw:       (N, Cin, H, W) float32
    weight_oihw:  (Cout, Cin, 3, 3)
    gamma, beta:  (Cout,)
    compute_dtype: dtype fed to the MXU (use jnp.bfloat16 on v6e/v7x for speed;
                   accumulation, norm and ReLU always stay f32).
    returns       (N, Cout, H, W) float32
    """
    N, Cin, H, W = x_nchw.shape
    Cout = weight_oihw.shape[0]
    K = 9 * Cin
    HW = H * W

    # Spatial zero-pad (pad=1) + im2col once in the wrapper (cheap at small Cin):
    # patches[n, (kh,kw,cin), h*W+w] = x_pad[n, cin, h+kh, w+kw]
    x_pad = jnp.pad(x_nchw, ((0, 0), (0, 0), (1, 1), (1, 1)))
    taps = [x_pad[:, :, kh:kh + H, kw:kw + W]
            for kh in range(3) for kw in range(3)]
    patches = jnp.stack(taps, axis=1).reshape(N, K, HW)

    # (Cout, Cin, 3, 3) -> (Cout, (kh, kw, cin)) to match the patch ordering.
    w2 = jnp.transpose(weight_oihw, (0, 2, 3, 1)).reshape(Cout, K)

    patches = patches.astype(compute_dtype)
    w2 = w2.astype(compute_dtype)
    gamma2 = gamma.reshape(Cout, 1).astype(jnp.float32)
    beta2 = beta.reshape(Cout, 1).astype(jnp.float32)

    out = pl.pallas_call(
        _inconv_kernel,
        out_shape=jax.ShapeDtypeStruct((N, Cout, HW), jnp.float32),
        grid=(N,),
        in_specs=[
            pl.BlockSpec((Cout, K), lambda n: (0, 0)),        # weights (resident)
            pl.BlockSpec((None, K, HW), lambda n: (n, 0, 0)),  # patches, batch squeezed
            pl.BlockSpec((Cout, 1), lambda n: (0, 0)),         # gamma
            pl.BlockSpec((Cout, 1), lambda n: (0, 0)),         # beta
        ],
        out_specs=pl.BlockSpec((None, Cout, HW), lambda n: (n, 0, 0)),
        compiler_params=pltpu.CompilerParams(
            dimension_semantics=("parallel",),  # batch steps shard across TCs (v7x)
        ),
    )(w2, patches, gamma2, beta2)

    return out.reshape(N, Cout, H, W)


def _reference(x_nchw, weight_oihw, gamma, beta):
    # Plain-JAX reference for correctness checking (matches PyTorch semantics).
    y = jax.lax.conv_general_dilated(
        x_nchw, weight_oihw,
        window_strides=(1, 1), padding=((1, 1), (1, 1)),
        dimension_numbers=("NCHW", "OIHW", "NCHW"),
    )
    mean = jnp.mean(y, axis=(2, 3), keepdims=True)
    var = jnp.mean((y - mean) ** 2, axis=(2, 3), keepdims=True)
    yn = (y - mean) * jax.lax.rsqrt(var + 1e-5)
    yn = yn * gamma.reshape(1, -1, 1, 1) + beta.reshape(1, -1, 1, 1)
    return jnp.maximum(yn, 0.0)


if __name__ == "__main__":
    # INConvBlock(nin=4, nout=8, stride=1, instance_norm=True, act=ReLU)
    N, Cin, H, W = 2, 4, 16, 16
    Cout = 8

    key = jax.random.PRNGKey(0)
    kx, kw, kg, kb = jax.random.split(key, 4)

    x = jax.random.normal(kx, (N, Cin, H, W), dtype=jnp.float32)
    # Conv2d weight (bias=False since instance_norm=True): (Cout, Cin, 3, 3)
    weight = jax.random.normal(kw, (Cout, Cin, 3, 3), dtype=jnp.float32) * 0.1
    # InstanceNorm2d affine params (deterministic, nontrivial)
    gamma = 1.0 + 0.1 * jax.random.normal(kg, (Cout,), dtype=jnp.float32)
    beta = 0.1 * jax.random.normal(kb, (Cout,), dtype=jnp.float32)

    ref = jax.block_until_ready(_reference(x, weight, gamma, beta))

    # f32 MXU path (accuracy mode / v5e default)
    out_f32 = jax.block_until_ready(
        in_conv_block(x, weight, gamma, beta, compute_dtype=jnp.float32))
    assert out_f32.shape == (N, Cout, H, W)
    assert jnp.allclose(out_f32, ref, rtol=5e-4, atol=5e-4), \
        "f32 kernel mismatch vs reference"

    # bf16 MXU path (recommended for v6e/v7x); norm/ReLU still f32 -> loose check.
    out_bf16 = jax.block_until_ready(
        in_conv_block(x, weight, gamma, beta, compute_dtype=jnp.bfloat16))
    assert out_bf16.shape == (N, Cout, H, W)
    assert jnp.allclose(out_bf16, ref, rtol=5e-2, atol=5e-2), \
        "bf16 kernel mismatch vs reference"

    print("KERNEL_OK")
</pallas_src>

<mosaic_0001>
module attributes {stable_mosaic.version = 11 : i64} {
  func.func @_inconv_kernel(%arg0: i32, %arg1: memref<8x36xf32, #tpu.memory_space<vmem>>, %arg2: memref<1x36x256xf32, #tpu.memory_space<vmem>>, %arg3: memref<8x1xf32, #tpu.memory_space<vmem>>, %arg4: memref<8x1xf32, #tpu.memory_space<vmem>>, %arg5: memref<1x8x256xf32, #tpu.memory_space<vmem>>) attributes {dimension_semantics = [#tpu.dimension_semantics<parallel>], iteration_bounds = array<i64: 2>, scalar_prefetch = 0 : i64, scratch_operands = 0 : i64, tpu.core_type = #tpu.core_type<tc>, window_params = [{pipeline_mode = #tpu.pipeline_mode<synchronous>, transform_indices = @transform_0, window_bounds = array<i64: 8, 36>}, {transform_indices = @transform_1, window_bounds = array<i64: 1, 36, 256>}, {pipeline_mode = #tpu.pipeline_mode<synchronous>, transform_indices = @transform_2, window_bounds = array<i64: 8, 1>}, {pipeline_mode = #tpu.pipeline_mode<synchronous>, transform_indices = @transform_3, window_bounds = array<i64: 8, 1>}, {transform_indices = @transform_4, window_bounds = array<i64: 1, 8, 256>}]} {
    %c0 = arith.constant 0 : index
    %c0_0 = arith.constant 0 : index
    %0 = vector.load %arg1[%c0, %c0_0] : memref<8x36xf32, #tpu.memory_space<vmem>>, vector<8x36xf32>
    %c0_1 = arith.constant 0 : index
    %c0_2 = arith.constant 0 : index
    %c0_3 = arith.constant 0 : index
    %1 = vector.load %arg2[%c0_1, %c0_2, %c0_3] : memref<1x36x256xf32, #tpu.memory_space<vmem>>, vector<1x36x256xf32>
    %2 = vector.shape_cast %1 : vector<1x36x256xf32> to vector<36x256xf32>
    %cst = arith.constant dense<0.000000e+00> : vector<8x256xf32>
    %3 = tpu.matmul %0, %2, %cst {dimension_numbers = #tpu.dot_dimension_numbers<[1], [0], [0], [1], [0, 0, 1, 1], [], []>} : vector<8x36xf32>, vector<36x256xf32>, vector<8x256xf32> -> vector<8x256xf32>
    %cst_4 = arith.constant dense<0.000000e+00> : vector<8xf32>
    %4 = vector.multi_reduction <add>, %3, %cst_4 [1] : vector<8x256xf32> to vector<8xf32>
    %5 = vector.shape_cast %4 : vector<8xf32> to vector<8x1xf32>
    %6 = arith.mulf %3, %3 : vector<8x256xf32>
    %cst_5 = arith.constant dense<0.000000e+00> : vector<8xf32>
    %7 = vector.multi_reduction <add>, %6, %cst_5 [1] : vector<8x256xf32> to vector<8xf32>
    %8 = vector.shape_cast %7 : vector<8xf32> to vector<8x1xf32>
    %cst_6 = arith.constant 3.906250e-03 : f32
    %9 = vector.broadcast %cst_6 : f32 to vector<8x1xf32>
    %10 = arith.mulf %5, %9 : vector<8x1xf32>
    %cst_7 = arith.constant 3.906250e-03 : f32
    %11 = vector.broadcast %cst_7 : f32 to vector<8x1xf32>
    %12 = arith.mulf %8, %11 : vector<8x1xf32>
    %13 = arith.mulf %10, %10 : vector<8x1xf32>
    %14 = arith.subf %12, %13 : vector<8x1xf32>
    %c0_8 = arith.constant 0 : index
    %c0_9 = arith.constant 0 : index
    %15 = vector.load %arg3[%c0_8, %c0_9] : memref<8x1xf32, #tpu.memory_space<vmem>>, vector<8x1xf32>
    %cst_10 = arith.constant 9.99999974E-6 : f32
    %16 = vector.broadcast %cst_10 : f32 to vector<8x1xf32>
    %17 = arith.addf %14, %16 : vector<8x1xf32>
    %18 = math.rsqrt %17 : vector<8x1xf32>
    %19 = arith.mulf %15, %18 : vector<8x1xf32>
    %c0_11 = arith.constant 0 : index
    %c0_12 = arith.constant 0 : index
    %20 = vector.load %arg4[%c0_11, %c0_12] : memref<8x1xf32, #tpu.memory_space<vmem>>, vector<8x1xf32>
    %21 = arith.mulf %10, %19 : vector<8x1xf32>
    %22 = arith.subf %20, %21 : vector<8x1xf32>
    %23 = vector.broadcast %19 : vector<8x1xf32> to vector<8x256xf32>
    %24 = arith.mulf %3, %23 : vector<8x256xf32>
    %25 = vector.broadcast %22 : vector<8x1xf32> to vector<8x256xf32>
    %26 = arith.addf %24, %25 : vector<8x256xf32>
    %cst_13 = arith.constant 0.000000e+00 : f32
    %27 = vector.broadcast %cst_13 : f32 to vector<8x256xf32>
    %28 = arith.maximumf %26, %27 : vector<8x256xf32>
    %c0_14 = arith.constant 0 : index
    %c0_15 = arith.constant 0 : index
    %c0_16 = arith.constant 0 : index
    %29 = vector.load %arg5[%c0_14, %c0_15, %c0_16] : memref<1x8x256xf32, #tpu.memory_space<vmem>>, vector<1x8x256xf32>
    %30 = vector.shape_cast %29 : vector<1x8x256xf32> to vector<8x256xf32>
    %31 = vector.shape_cast %28 : vector<8x256xf32> to vector<1x8x256xf32>
    tpu.vector_store %arg5[%c0_14, %c0_15, %c0_16], %31 {strides = array<i32>} : memref<1x8x256xf32, #tpu.memory_space<vmem>>, vector<1x8x256xf32>,
    return
  }
  func.func @transform_0(%arg0: i32) -> (i32, i32) {
    %c0_i32 = arith.constant 0 : i32
    %c0_i32_0 = arith.constant 0 : i32
    %c0_i32_1 = arith.constant 0 : i32
    return %c0_i32, %c0_i32_0 : i32, i32
  }
  func.func @transform_1(%arg0: i32) -> (i32, i32, i32) {
    %c0_i32 = arith.constant 0 : i32
    %c0_i32_0 = arith.constant 0 : i32
    %c0_i32_1 = arith.constant 0 : i32
    return %arg0, %c0_i32, %c0_i32_0 : i32, i32, i32
  }
  func.func @transform_2(%arg0: i32) -> (i32, i32) {
    %c0_i32 = arith.constant 0 : i32
    %c0_i32_0 = arith.constant 0 : i32
    %c0_i32_1 = arith.constant 0 : i32
    return %c0_i32, %c0_i32_0 : i32, i32
  }
  func.func @transform_3(%arg0: i32) -> (i32, i32) {
    %c0_i32 = arith.constant 0 : i32
    %c0_i32_0 = arith.constant 0 : i32
    %c0_i32_1 = arith.constant 0 : i32
    return %c0_i32, %c0_i32_0 : i32, i32
  }
  func.func @transform_4(%arg0: i32) -> (i32, i32, i32) {
    %c0_i32 = arith.constant 0 : i32
    %c0_i32_0 = arith.constant 0 : i32
    %c0_i32_1 = arith.constant 0 : i32
    return %arg0, %c0_i32, %c0_i32_0 : i32, i32, i32
  }
}

</mosaic_0001>

<llo_original>
// kernel: tpu_custom_call.1
$region0: #{tpu_custom_call.1}
  #allocation0 [shape = 'u32[]', space=smem, size = 0x4, offset = 0x4, fixed_abs, tag = 'smem constant byte address 0x4 - core index']
  #allocation1 [shape = 'u32[144,128]{1,0:T(1,128)}', space=vmem, size = 0x12000, scoped, tag = 'internal scratch']
  %s0 = inlined_call_operand.vmem [shape: f32[8,36], index: 0, kind: input, shape index: {}]
  %s1 = inlined_call_operand.vmem [shape: f32[2,36,256], index: 1, kind: input, shape index: {}]
  %s2 = inlined_call_operand.vmem [shape: f32[8,1], index: 2, kind: input, shape index: {}]
  %s3 = inlined_call_operand.vmem [shape: f32[8,1], index: 3, kind: input, shape index: {}]
  %s4 = inlined_call_operand.hbm [shape: f32[2,8,256], index: 4, kind: output, shape index: {}]
  %s5 = sld [smem:[#allocation0]]
  $region49: #{tpu_custom_call.1} parent=0
    _
  %s7 = ssub.s32 1, %s5
  %s8 = scalar_select 0, %s7, %s5
  $region1: #{tpu_custom_call.1} parent=0
    #allocation2 [shape = 'u8[16384]{0}', space=vmem, size = 0x4000, scoped, tag = 'output window, operand 0']
    #allocation3 [shape = 's32[2]{0}', space=sflag, size = 0x8, scoped, tag = 'scoped memory for tpu_custom_call.1']
    %9 = vsyncpa [#allocation3], 0
    %s10 = scalar_lea.sflag [#allocation3], 1
    %11 = vsyncpa %s10, 0
    loop: start=0, step=1, limit=4
    $region2: #{tpu_custom_call.1} parent=1 // loop_pre_header
      _
    $region3: #{tpu_custom_call.1} parent=1 // loop_header
      %s13 = sphi 0, %s17
      %p14 = scmp.ge.s32.totalorder %s13, 4
      %s21 = sphi 0, %s21
      %s23 = sphi 0, %s21
      %s24 = sphi 0, %s23
      %s38 = sphi 0, %s24
      %s44 = sphi 0, %s46
      %s47 = sphi 0, %s44
      %s48 = sphi 0, %s47
      %s64 = sphi 0, %s48
      %s68 = sphi 0, %s68
      %s70 = sphi 0, %s68
      %s71 = sphi 0, %s70
      %s85 = sphi 0, %s71
      %s89 = sphi 0, %s89
      %s91 = sphi 0, %s89
      %s92 = sphi 0, %s91
      %s106 = sphi 0, %s92
      %s112 = sphi 0, %s114
      %s115 = sphi 0, %s112
      %s116 = sphi 0, %s115
      %s132 = sphi 0, %s116
    $region4: #{tpu_custom_call.1} parent=1 // loop_header_branch
      %16 = sbr.rel (%p14) target = $region8
    $region5: #{tpu_custom_call.1} parent=1 // loop_body
      %s18 = ssub.s32 %s13, 1
      %s19 = ssub.s32 %s13, 2
      %s20 = sadd.s32 %s13, 1
      %s22 = sadd.s32 %s21, 1
      %p25 = scmp.eq.s32.totalorder %s13, 1
      %p26 = scmp.ne.s32.totalorder %s21, %s23
      %p27 = scmp.eq.s32.totalorder %s13, 0
      %p28 = por %p26, %p27
      %p29 = scmp.ne.s32.totalorder %s21, %s23
      %p30 = scmp.eq.s32.totalorder %s18, 1
      %p31 = por %p29, %p30
      %p32 = scmp.ne.s32.totalorder %s23, %s24
      %p33 = scmp.eq.s32.totalorder %s18, 0
      %p34 = por %p32, %p33
      %p35 = scmp.ne.s32.totalorder %s23, %s24
      %p36 = scmp.eq.s32.totalorder %s19, 1
      %p37 = por %p35, %p36
      %p39 = scmp.ne.s32.totalorder %s24, %s38
      %p40 = scmp.eq.s32.totalorder %s19, 0
      %p41 = por %p39, %p40
      %s42 = ssub.s32 %s13, %s20
      %p43 = scmp.eq.s32.totalorder %s42, 0
      %s45 = sadd.s32 %s44, 1
      %s46 = scalar_select %p43, %s44, %s45
      %p49 = pneg %p43
      %p50 = scmp.eq.s32.totalorder %s13, 1
      %p51 = por %p49, %p50
      %p52 = scmp.ne.s32.totalorder %s44, %s47
      %p53 = scmp.eq.s32.totalorder %s13, 0
      %p54 = por %p52, %p53
      %p55 = scmp.ne.s32.totalorder %s44, %s47
      %p56 = scmp.eq.s32.totalorder %s18, 1
      %p57 = por %p55, %p56
      %p58 = scmp.ne.s32.totalorder %s47, %s48
      %p59 = scmp.eq.s32.totalorder %s18, 0
      %p60 = por %p58, %p59
      %p61 = scmp.ne.s32.totalorder %s47, %s48
      %p62 = scmp.eq.s32.totalorder %s19, 1
      %p63 = por %p61, %p62
      %p65 = scmp.ne.s32.totalorder %s48, %s64
      %p66 = scmp.eq.s32.totalorder %s19, 0
      %p67 = por %p65, %p66
      %s69 = sadd.s32 %s68, 1
      %p72 = scmp.eq.s32.totalorder %s13, 1
      %p73 = scmp.ne.s32.totalorder %s68, %s70
      %p74 = scmp.eq.s32.totalorder %s13, 0
      %p75 = por %p73, %p74
      %p76 = scmp.ne.s32.totalorder %s68, %s70
      %p77 = scmp.eq.s32.totalorder %s18, 1
      %p78 = por %p76, %p77
      %p79 = scmp.ne.s32.totalorder %s70, %s71
      %p80 = scmp.eq.s32.totalorder %s18, 0
      %p81 = por %p79, %p80
      %p82 = scmp.ne.s32.totalorder %s70, %s71
      %p83 = scmp.eq.s32.totalorder %s19, 1
      %p84 = por %p82, %p83
      %p86 = scmp.ne.s32.totalorder %s71, %s85
      %p87 = scmp.eq.s32.totalorder %s19, 0
      %p88 = por %p86, %p87
      %s90 = sadd.s32 %s89, 1
      %p93 = scmp.eq.s32.totalorder %s13, 1
      %p94 = scmp.ne.s32.totalorder %s89, %s91
      %p95 = scmp.eq.s32.totalorder %s13, 0
      %p96 = por %p94, %p95
      %p97 = scmp.ne.s32.totalorder %s89, %s91
      %p98 = scmp.eq.s32.totalorder %s18, 1
      %p99 = por %p97, %p98
      %p100 = scmp.ne.s32.totalorder %s91, %s92
      %p101 = scmp.eq.s32.totalorder %s18, 0
      %p102 = por %p100, %p101
      %p103 = scmp.ne.s32.totalorder %s91, %s92
      %p104 = scmp.eq.s32.totalorder %s19, 1
      %p105 = por %p103, %p104
      %p107 = scmp.ne.s32.totalorder %s92, %s106
      %p108 = scmp.eq.s32.totalorder %s19, 0
      %p109 = por %p107, %p108
      %s110 = ssub.s32 %s13, %s20
      %p111 = scmp.eq.s32.totalorder %s110, 0
      %s113 = sadd.s32 %s112, 1
      %s114 = scalar_select %p111, %s112, %s113
      %p117 = pneg %p111
      %p118 = scmp.eq.s32.totalorder %s13, 1
      %p119 = por %p117, %p118
      %p120 = scmp.ne.s32.totalorder %s112, %s115
      %p121 = scmp.eq.s32.totalorder %s13, 0
      %p122 = por %p120, %p121
      %p123 = scmp.ne.s32.totalorder %s112, %s115
      %p124 = scmp.eq.s32.totalorder %s18, 1
      %p125 = por %p123, %p124
      %p126 = scmp.ne.s32.totalorder %s115, %s116
      %p127 = scmp.eq.s32.totalorder %s18, 0
      %p128 = por %p126, %p127
      %p129 = scmp.ne.s32.totalorder %s115, %s116
      %p130 = scmp.eq.s32.totalorder %s19, 1
      %p131 = por %p129, %p130
      %p133 = scmp.ne.s32.totalorder %s116, %s132
      %p134 = scmp.eq.s32.totalorder %s19, 0
      %p135 = por %p133, %p134
      %p136 = scmp.le.s32.totalorder 1, %s13
      %p137 = scmp.lt.s32.totalorder %s13, 3
      %p138 = pnand %p136, %p137
      %p139 = pneg %p138
      // Predicated region
      $region9: #{tpu_custom_call.1} parent=5 // pred_check
        _
      $region10: #{tpu_custom_call.1} parent=5 // pred_check_branch
        %141 = sbr.rel (%p138) target = $region12
      $region11: #{tpu_custom_call.1} parent=5 // pred_region
        %s142 = ssub.s32 %s13, 1
        // Predicated region
        $region13: #{tpu_custom_call.1} parent=11 // pred_check
          %p143 = pneg %p34
        $region14: #{tpu_custom_call.1} parent=11 // pred_check_branch
          %145 = sbr.rel (%p143) target = $region16
        $region15: #{tpu_custom_call.1} parent=11 // pred_region
          _
        $region16: #{tpu_custom_call.1} parent=11 // pred_fallthru
          _
        // Predicated region
        $region17: #{tpu_custom_call.1} parent=11 // pred_check
          %p146 = pneg %p81
        $region18: #{tpu_custom_call.1} parent=11 // pred_check_branch
          %148 = sbr.rel (%p146) target = $region20
        $region19: #{tpu_custom_call.1} parent=11 // pred_region
          _
        $region20: #{tpu_custom_call.1} parent=11 // pred_fallthru
          _
        // Predicated region
        $region21: #{tpu_custom_call.1} parent=11 // pred_check
          %p149 = pneg %p102
        $region22: #{tpu_custom_call.1} parent=11 // pred_check_branch
          %151 = sbr.rel (%p149) target = $region24
        $region23: #{tpu_custom_call.1} parent=11 // pred_region
          _
        $region24: #{tpu_custom_call.1} parent=11 // pred_fallthru
          _
      $region12: #{tpu_custom_call.1} parent=5 // pred_fallthru
        _
      %p152 = scmp.lt.s32.totalorder %s13, 2
      // Predicated region
      $region25: #{tpu_custom_call.1} parent=5 // pred_check
        %p153 = pneg %p152
      $region26: #{tpu_custom_call.1} parent=5 // pred_check_branch
        %155 = sbr.rel (%p153) target = $region28
      $region27: #{tpu_custom_call.1} parent=5 // pred_region
        // Predicated region
        $region29: #{tpu_custom_call.1} parent=27 // pred_check
          %p156 = pneg %p54
        $region30: #{tpu_custom_call.1} parent=27 // pred_check_branch
          %158 = sbr.rel (%p156) target = $region32
        $region31: #{tpu_custom_call.1} parent=27 // pred_region
          %p159 = scmp.lt.s32.totalorder %s13, 1
          %s160 = scalar_select %p159, %s13, 1
          %s161 = smul.addr %s160, 10
          %s162 = smul.addr %s161, 8
          %s163 = scalar_lea.vmem %s1, %s162
        $region32: #{tpu_custom_call.1} parent=27 // pred_fallthru
          _
      $region28: #{tpu_custom_call.1} parent=5 // pred_fallthru
        _
      %p164 = scmp.le.s32.totalorder 1, %s13
      %p165 = scmp.lt.s32.totalorder %s13, 3
      %p166 = pnand %p164, %p165
      %p167 = pneg %p166
      // Predicated region
      $region33: #{tpu_custom_call.1} parent=5 // pred_check
        _
      $region34: #{tpu_custom_call.1} parent=5 // pred_check_branch
        %169 = sbr.rel (%p166) target = $region36
      $region35: #{tpu_custom_call.1} parent=5 // pred_region
        %s170 = ssub.s32 %s13, 1
        %p171 = pneg %p34
        %p172 = pneg %p31
        %p173 = scmp.lt.s32.totalorder %s18, 1
        %s174 = scalar_select %p173, %s18, 1
        %s175 = smul.addr %s174, 10
        %s176 = smul.addr %s175, 8
        %s177 = scalar_lea.vmem %s1, %s176
        %p178 = pneg %p60
        %p179 = pneg %p57
        %p180 = pneg %p81
        %p181 = pneg %p78
        %p182 = pneg %p102
        %p183 = pneg %p99
        %p184 = pneg %p128
        %p185 = pneg %p125
        %s186 = sand.u32 %s115, 1
        %s187 = scalar_lea.sflag [#allocation3], %s186
        %s188 = sand.u32 %s115, 1
        %s189 = smul.addr %s188, 16
        %s190 = scalar_lea.vmem [#allocation2], %s189
        %p191 = scmp.lt.s32.totalorder %s18, 1
        %s192 = scalar_select %p191, %s18, 1
        %s193 = smul.addr %s192, 10
        %s194 = smul.addr %s193, 8
        %s195 = scalar_lea.vmem %s1, %s194
        %v196 = vld [vmem:[%s0] sm:$0xff]
        %v197 = vld [vmem:[%s195] sm:$0xff]
        %v198 = vld [vmem:[%s195 + $0x8] sm:$0xff]
        %v199 = vld [vmem:[%s195 + $0x10] sm:$0xff]
        %v200 = vld [vmem:[%s195 + $0x18] sm:$0xff]
        %v201 = vld [vmem:[%s195 + $0x20] sm:$0xff]
        %v202 = vld [vmem:[%s195 + $0x28] sm:$0xff]
        %v203 = vld [vmem:[%s195 + $0x30] sm:$0xff]
        %v204 = vld [vmem:[%s195 + $0x38] sm:$0xff]
        %v205 = vld [vmem:[%s195 + $0x40] sm:$0xf]
        %v206 = vld [vmem:[%s195 + $0x48] sm:$0xf]
        %vm207 = vcmask 293888
        %v209 = vsel %vm207, %v196, 0
        %vm211 = vcmask 1043456
        %v213 = vsel %vm211, %v205, 0
        %v216 = vsel %vm211, %v206, 0
        %218 = vmatprep.subr.mxu0 %v198
        %219 = vmatpush1.msra.mxu0 %v197
        %220 = vmatprep.subr.mxu0 %v200
        %221 = vmatpush1.msra.mxu0 %v199
        %222 = vmatprep.subr.mxu0 %v202
        %223 = vmatpush1.msra.mxu0 %v201
        %224 = vmatprep.subr.mxu0 %v204
        %225 = vmatpush1.msra.mxu0 %v203
        %226 = vmatprep.subr.mxu0 %v216
        %227 = vmatpush1.msra.mxu0 %v213
        %228 = vmatprep.subr.mxu0 0.0
        %229 = vmatpush1.msra.mxu0 0.0
        %230 = vmatprep.subr.mxu0 0.0
        %231 = vmatpush1.msra.mxu0 0.0
        %232 = vmatprep.subr.mxu0 0.0
        %233 = vmatpush1.msra.mxu0 0.0
        %234 = vmatprep.subr.mxu0 0.0
        %235 = vmatpush1.msra.mxu0 0.0
        %236 = vmatprep.subr.mxu0 0.0
        %237 = vmatpush1.msra.mxu0 0.0
        %238 = vmatprep.subr.mxu0 0.0
        %239 = vmatpush1.msra.mxu0 0.0
        %240 = vmatprep.subr.mxu0 0.0
        %241 = vmatpush1.msra.mxu0 0.0
        %242 = vmatprep.subr.mxu0 0.0
        %243 = vmatpush1.msra.mxu0 0.0
        %244 = vmatprep.subr.mxu0 0.0
        %245 = vmatpush1.msra.mxu0 0.0
        %246 = vmatprep.subr.mxu0 0.0
        %247 = vmatpush1.msra.mxu0 0.0
        %248 = vmatprep.subr.mxu0 0.0
        %249 = vmatpush1.msra.mxu0 0.0
        %250 = vmatprep.subr.mxu0 0.0
        %251 = vmatpush1.msra.mxu0 0.0
        %252 = vmatprep.subr.mxu0 0.0
        %253 = vmatpush1.msra.mxu0 0.0
        %254 = vmatprep.subr.mxu0 0.0
        %255 = vmatpush1.msra.mxu0 0.0
        %256 = vmatprep.subr.mxu0 0.0
        %257 = vmatpush1.msra.mxu0 0.0
        %258 = vmatprep.subr.mxu0 0.0
        %259 = vmatpush1.msra.mxu0 0.0
        %260 = vmatprep.subr.mxu0 0.0
        %261 = vmatpush1.msra.mxu0 0.0
        %262 = vmatprep.subr.mxu0 0.0
        %263 = vmatpush1.msra.mxu0 0.0
        %264 = vmatprep.subr.mxu0 0.0
        %265 = vmatpush1.msra.mxu0 0.0
        %266 = vmatprep.subr.mxu0 0.0
        %267 = vmatpush1.msra.mxu0 0.0
        %268 = vmatprep.subr.mxu0 0.0
        %269 = vmatpush1.msra.mxu0 0.0
        %270 = vmatprep.subr.mxu0 0.0
        %271 = vmatpush1.msra.mxu0 0.0
        %272 = vmatprep.subr.mxu0 0.0
        %273 = vmatpush1.msra.mxu0 0.0
        %274 = vmatprep.subr.mxu0 0.0
        %275 = vmatpush1.msra.mxu0 0.0
        %276 = vmatprep.subr.mxu0 0.0
        %277 = vmatpush1.msra.mxu0 0.0
        %278 = vmatprep.subr.mxu0 0.0
        %279 = vmatpush1.msra.mxu0 0.0
        %280 = vmatprep.subr.mxu0 0.0
        %281 = vmatpush1.msra.mxu0 0.0
        %282 = vmatprep.mubr.f32.mxu0 0.0
        %283 = vmatmul.mubr.f32.gmra.mrb[0].mxu0 %v209
        %v284 = vpop.f32.mrb[0].mxu0
        %v285 = vadd.f32 0.0, %v284
        %v286 = vpop.f32.mrb[0].mxu0
        %v287 = vadd.f32 0.0, %v286
        %288 = vdwg.mxu0
        %v289 = vadd.f32 %v285, %v287
        %290 = vadd.xlane.f32.xlu0 %v289
        %v291 = vpop.xlane.xlu0 %290
        %v292 = vmul.f32 %v285, %v285
        %v293 = vmul.f32 %v287, %v287
        %v294 = vadd.f32 %v292, %v293
        %295 = vadd.xlane.f32.xlu0 %v294
        %v296 = vpop.xlane.xlu0 %295
        %v297 = vmul.f32 %v291, 0.00390625
        %v298 = vmul.f32 %v296, 0.00390625
        %v299 = vmul.f32 %v297, %v297
        %v300 = vsub.f32 %v298, %v299
        %v301 = vld [vmem:[%s2] sm:$0xff]
        %v302 = vadd.f32 %v300, 1e-05
        %v303 = vrsqrt.pop %v302
        %v304 = vmul.f32 %v301, %v303
        %v305 = vld [vmem:[%s3] sm:$0xff]
        %v306 = vmul.f32 %v297, %v304
        %v307 = vsub.f32 %v305, %v306
        %309 = vset.pattern.permute.xlu0 0
        %310 = vperm.xlu0 %309, %v304
        %v311 = vpop.permute.xlu0 %310
        %v313 = vmul.f32 %v285, %v311
        %v314 = vmul.f32 %v287, %v311
        %316 = vset.pattern.permute.xlu0 0
        %317 = vperm.xlu0 %316, %v307
        %v318 = vpop.permute.xlu0 %317
        %v320 = vadd.f32 %v313, %v318
        %v321 = vadd.f32 %v314, %v318
        %v322 = vmax.f32 %v320, 0.0
        %v323 = vmax.f32 %v321, 0.0
        %324 = vst [vmem:[%s190] sm:$0xff] %v322
        %325 = vst [vmem:[%s190 + $0x8] sm:$0xff] %v323
        %s326 = sand.u32 %s115, 1
        %s327 = scalar_lea.sflag [#allocation3], %s326
        %s328 = sand.u32 %s115, 1
        %s329 = smul.addr %s328, 16
        %s330 = scalar_lea.vmem [#allocation2], %s329
        // Predicated region
        $region37: #{tpu_custom_call.1} parent=35 // pred_check
          %p331 = pneg %p125
        $region38: #{tpu_custom_call.1} parent=35 // pred_check_branch
          %333 = sbr.rel (%p331) target = $region40
        $region39: #{tpu_custom_call.1} parent=35 // pred_region
          %s335 = ssub.s32 256, 256
          %336 = vsyncadd %s327, %s335
          %s337 = smul.addr %s18, 2
          %s338 = smul.addr %s337, 128
          %s339 = scalar_lea.hbm %s4, %s338
          %s341 = sshll.u32 %s330, 4
          %s342 = int_to_ptr.vmem [resolvable:$true] %s341
          %344 = dma.vmem_to_hbm [thread:$0]  %s342, 256, %s339, %s327
        $region40: #{tpu_custom_call.1} parent=35 // pred_fallthru
          _
      $region36: #{tpu_custom_call.1} parent=5 // pred_fallthru
        _
      %p345 = scmp.le.s32.totalorder 2, %s13
      // Predicated region
      $region41: #{tpu_custom_call.1} parent=5 // pred_check
        %p346 = pneg %p345
      $region42: #{tpu_custom_call.1} parent=5 // pred_check_branch
        %348 = sbr.rel (%p346) target = $region44
      $region43: #{tpu_custom_call.1} parent=5 // pred_region
        %s349 = ssub.s32 %s13, 2
        // Predicated region
        $region45: #{tpu_custom_call.1} parent=43 // pred_check
          %p350 = pneg %p131
        $region46: #{tpu_custom_call.1} parent=43 // pred_check_branch
          %352 = sbr.rel (%p350) target = $region48
        $region47: #{tpu_custom_call.1} parent=43 // pred_region
          %s353 = sand.u32 %s116, 1
          %s354 = scalar_lea.sflag [#allocation3], %s353
          %s355 = sand.u32 %s116, 1
          %s356 = smul.addr %s355, 16
          %s357 = scalar_lea.vmem [#allocation2], %s356
          %358 = dma.done %s354, 256
        $region48: #{tpu_custom_call.1} parent=43 // pred_fallthru
          _
      $region44: #{tpu_custom_call.1} parent=5 // pred_fallthru
        _
    $region6: #{tpu_custom_call.1} parent=1 // loop_footer
      %s17 = sadd.s32 1, %s13
    $region7: #{tpu_custom_call.1} parent=1 // loop_footer_branch
      %12 = sbr.rel target = $region3
    $region8: #{tpu_custom_call.1} parent=1 // loop_exit
      _
    %359 = vsyncpa [#allocation3], 1
    %s360 = scalar_lea.sflag [#allocation3], 1
    %361 = vsyncpa %s360, 1

</llo_original>
